<compile_context>
chip_gen: v6e
topology: v6e:2x2x1
jax: 0.10.0
libtpu: 0.0.40
codegen_flags: <defaults>
</compile_context>

<pallas_src>
import functools

import numpy as np
import jax
import jax.numpy as jnp
from jax.experimental import pallas as pl
from jax.experimental.pallas import tpu as pltpu

N_LANDMARKS = 194
LM_DIM = N_LANDMARKS * 2        # 388 landmark scalars (x, y per landmark)
N_COL_SPLITS = 2                # column halves (one per TensorCore on v7x)
LM_HALF = LM_DIM // N_COL_SPLITS  # 194

# cv2.COLOR_BGR2GRAY coefficients, channel order (B, G, R)
_BGR2GRAY = (0.114, 0.587, 0.299)


# ----------------------------------------------------------------------------
# Fused kernel: quantize + delta + projection (K-tiled accumulate) + L1 epilogue
# ----------------------------------------------------------------------------
def _fused_landmark_loss_kernel(x_ref, y_ref, d_ref, w_ref, out_ref, acc_ref,
                                *, inv_scale):
    # x_ref, y_ref: (N*C, TK) f32   flattened spatial tiles of x and y
    # d_ref       : (N, N*C) f32    gray coefficients + per-image channel sum
    # w_ref       : (1, TK, 194) bf16  synthetic "shape predictor" column half
    # out_ref     : (8, 128) f32    partial |.| sum of this column half
    # acc_ref     : (N*C, 194) f32  VMEM accumulator
    k = pl.program_id(1)

    @pl.when(k == 0)
    def _init():
        acc_ref[...] = jnp.zeros_like(acc_ref)

    # uint8 quantization exactly as in forward():
    #   0.5*(x+1) -> [0,1]; .mul(255).add_(0.5).clamp_(0,255); uint8 = floor
    # folded into one FMA: 0.5*(x+1)*255 + 0.5 == x*127.5 + 128.0
    qx = jnp.floor(jnp.clip(x_ref[...] * 127.5 + 128.0, 0.0, 255.0))
    qy = jnp.floor(jnp.clip(y_ref[...] * 127.5 + 128.0, 0.0, 255.0))
    # gray/sum/subtract are all linear *after* quantization, so the x-y delta
    # can be taken per pixel; integers with |delta| <= 255 are exact in bf16.
    delta = (qx - qy).astype(jnp.bfloat16)
    acc_ref[...] += jnp.dot(delta, w_ref[0],
                            preferred_element_type=jnp.float32)

    @pl.when(k == pl.num_programs(1) - 1)
    def _finalize():
        # diff[n, :] = landmarks_x[n, half] - landmarks_y[n, half]   (N, 194)
        diff = jnp.dot(d_ref[...], acc_ref[...],
                       preferred_element_type=jnp.float32)
        partial = jnp.sum(jnp.abs(diff)) * inv_scale
        out_ref[...] = jnp.zeros_like(out_ref) + partial


def _choose_tiling(hw, nc, half, budget_bytes=24 << 20):
    """Pick contraction tile TK and (possibly padded) HW length."""
    def vmem_bytes(tk):
        wt = 2 * tk * half * 2          # weight tile, double-buffered (bf16)
        im = 2 * 2 * nc * tk * 4        # x and y tiles, double-buffered (f32)
        return wt + im

    for cand in (8192, 4096, 2048, 1024, 512, 256, 128):
        if vmem_bytes(cand) <= budget_bytes and hw % cand == 0:
            return cand, hw
    # No exact divisor within budget: pad HW up to a multiple of an in-budget
    # tile.  Padded weight ROWS are zero, so they contribute nothing to the
    # projection (image padding values are irrelevant).
    tk = 128
    for cand in (2048, 1024, 512, 256, 128):
        if vmem_bytes(cand) <= budget_bytes:
            tk = cand
            break
    hw_pad = -(-hw // tk) * tk
    return tk, hw_pad


# ----------------------------------------------------------------------------
# Module-equivalent wrapper
# ----------------------------------------------------------------------------
def landmark_loss(x, y, w_lm, *, tk=None):
    """x, y: (N, 3, H, W) float32 in [-1, 1] (NCHW, BGR). Returns scalar loss.

    w_lm: (H*W, 388) synthetic stand-in for the dlib 194-point shape predictor.
    """
    N, C, H, W = x.shape
    assert y.shape == x.shape and C == 3
    HW = H * W
    NC = N * C

    if tk is None:
        tk, hw_pad = _choose_tiling(HW, NC, LM_HALF)
    else:
        hw_pad = -(-HW // tk) * tk
    n_k = hw_pad // tk

    x2 = x.reshape(NC, HW).astype(jnp.float32)
    y2 = y.reshape(NC, HW).astype(jnp.float32)
    if hw_pad != HW:
        x2 = jnp.pad(x2, ((0, 0), (0, hw_pad - HW)))
        y2 = jnp.pad(y2, ((0, 0), (0, hw_pad - HW)))

    # bf16 weights, split into two column halves -> (2, HW_pad, 194); each
    # grid "c" slot (one per TensorCore on v7x) streams a disjoint half.
    w_bf = w_lm.astype(jnp.bfloat16)
    w3 = jnp.stack([w_bf[:, :LM_HALF], w_bf[:, LM_HALF:]], axis=0)
    if hw_pad != HW:
        w3 = jnp.pad(w3, ((0, 0), (0, hw_pad - HW), (0, 0)))  # zero rows

    # D matrix: gray = 0.114*B + 0.587*G + 0.299*R, summed per image n.
    d_np = np.zeros((N, NC), np.float32)
    for n in range(N):
        for c, coef in enumerate(_BGR2GRAY):
            d_np[n, n * C + c] = coef
    d_mat = jnp.asarray(d_np)

    kernel = functools.partial(
        _fused_landmark_loss_kernel,
        # L1Loss 'mean' over the N*388 real elements, then / count (= N).
        inv_scale=1.0 / float(N * LM_DIM * N),
    )

    out = pl.pallas_call(
        kernel,
        out_shape=jax.ShapeDtypeStruct((8 * N_COL_SPLITS, 128), jnp.float32),
        grid=(N_COL_SPLITS, n_k),
        in_specs=[
            pl.BlockSpec((NC, tk), lambda c, k: (0, k)),          # x tiles
            pl.BlockSpec((NC, tk), lambda c, k: (0, k)),          # y tiles
            pl.BlockSpec((N, NC), lambda c, k: (0, 0)),           # D (resident)
            pl.BlockSpec((1, tk, LM_HALF), lambda c, k: (c, k, 0)),  # weights
        ],
        out_specs=pl.BlockSpec((8, 128), lambda c, k: (c, 0)),
        scratch_shapes=[pltpu.VMEM((NC, LM_HALF), jnp.float32)],
        compiler_params=pltpu.CompilerParams(
            dimension_semantics=("parallel", "arbitrary"),
            vmem_limit_bytes=32 * 1024 * 1024),
    )(x2, y2, d_mat, w3)

    # TODO(synk): the `if 0 in x_face: loss = 0` branch depends on dlib face
    # detection results and is not representable; loss is always computed.
    return out[0, 0] + out[8, 0]


# Pure-JAX reference (same bf16-quantized weights) for a correctness check.
def _reference(x, y, w_lm):
    N, C, H, W = x.shape
    w = w_lm.astype(jnp.bfloat16).astype(jnp.float32)

    def quant(im):
        return jnp.floor(jnp.clip(0.5 * (im + 1.0) * 255.0 + 0.5, 0.0, 255.0))

    qx = quant(x).reshape(N, C, H * W)
    qy = quant(y).reshape(N, C, H * W)
    coefs = jnp.asarray(_BGR2GRAY, jnp.float32).reshape(1, 3, 1)
    gray_x = jnp.sum(coefs * qx, axis=1)
    gray_y = jnp.sum(coefs * qy, axis=1)
    lm_x = gray_x @ w
    lm_y = gray_y @ w
    return jnp.mean(jnp.abs(lm_x - lm_y)) / N


if __name__ == "__main__":
    key = jax.random.PRNGKey(0)
    kx, ky, kw = jax.random.split(key, 3)

    N, C, H, W = 2, 3, 16, 16
    x = jax.random.uniform(kx, (N, C, H, W), jnp.float32, -1.0, 1.0)
    y = jax.random.uniform(ky, (N, C, H, W), jnp.float32, -1.0, 1.0)
    # Deterministic synthetic "shape predictor" weights: (H*W, 194*2)
    w_lm = jax.random.normal(kw, (H * W, LM_DIM), jnp.float32) * 0.01

    # tk=128 -> grid=(2, 2): exercises both the column split and K accumulation.
    loss = jax.block_until_ready(landmark_loss(x, y, w_lm, tk=128))
    ref = jax.block_until_ready(_reference(x, y, w_lm))

    assert loss.shape == () and bool(jnp.isfinite(loss))
    np.testing.assert_allclose(np.asarray(loss), np.asarray(ref),
                               rtol=1e-2, atol=1e-5)
    print("KERNEL_OK")
</pallas_src>

<mosaic_0001>
module attributes {stable_mosaic.version = 11 : i64} {
  func.func @_fused_landmark_loss_kernel(%arg0: i32, %arg1: i32, %arg2: memref<6x128xf32, #tpu.memory_space<vmem>>, %arg3: memref<6x128xf32, #tpu.memory_space<vmem>>, %arg4: memref<2x6xf32, #tpu.memory_space<vmem>>, %arg5: memref<1x128x194xbf16, #tpu.memory_space<vmem>>, %arg6: memref<8x128xf32, #tpu.memory_space<vmem>>, %arg7: memref<6x194xf32, #tpu.memory_space<vmem>>) attributes {dimension_semantics = [#tpu.dimension_semantics<parallel>, #tpu.dimension_semantics<arbitrary>], iteration_bounds = array<i64: 2, 2>, scalar_prefetch = 0 : i64, scratch_operands = 1 : i64, tpu.core_type = #tpu.core_type<tc>, window_params = [{transform_indices = @transform_0, window_bounds = array<i64: 6, 128>}, {transform_indices = @transform_1, window_bounds = array<i64: 6, 128>}, {pipeline_mode = #tpu.pipeline_mode<synchronous>, transform_indices = @transform_2, window_bounds = array<i64: 2, 6>}, {transform_indices = @transform_3, window_bounds = array<i64: 1, 128, 194>}, {transform_indices = @transform_4, window_bounds = array<i64: 8, 128>}]} {
    %c0_i32 = arith.constant 0 : i32
    %0 = arith.cmpi eq, %arg1, %c0_i32 : i32
    %1 = arith.extui %0 : i1 to i32
    %c0_i32_0 = arith.constant 0 : i32
    %2 = arith.cmpi ne, %1, %c0_i32_0 : i32
    scf.if %2 {
      %cst_20 = arith.constant 0.000000e+00 : f32
      %34 = vector.broadcast %cst_20 : f32 to vector<6x194xf32>
      %c0_21 = arith.constant 0 : index
      %c0_22 = arith.constant 0 : index
      %35 = vector.load %arg7[%c0_21, %c0_22] : memref<6x194xf32, #tpu.memory_space<vmem>>, vector<6x194xf32>
      tpu.vector_store %arg7[%c0_21, %c0_22], %34 {strides = array<i32>} : memref<6x194xf32, #tpu.memory_space<vmem>>, vector<6x194xf32>,
    } else {
    }
    %c0 = arith.constant 0 : index
    %c0_1 = arith.constant 0 : index
    %3 = vector.load %arg2[%c0, %c0_1] : memref<6x128xf32, #tpu.memory_space<vmem>>, vector<6x128xf32>
    %cst = arith.constant 1.275000e+02 : f32
    %4 = vector.broadcast %cst : f32 to vector<6x128xf32>
    %5 = arith.mulf %3, %4 : vector<6x128xf32>
    %cst_2 = arith.constant 1.280000e+02 : f32
    %6 = vector.broadcast %cst_2 : f32 to vector<6x128xf32>
    %7 = arith.addf %5, %6 : vector<6x128xf32>
    %cst_3 = arith.constant 0.000000e+00 : f32
    %cst_4 = arith.constant 2.550000e+02 : f32
    %8 = vector.broadcast %cst_3 : f32 to vector<6x128xf32>
    %9 = arith.maximumf %8, %7 : vector<6x128xf32>
    %10 = vector.broadcast %cst_4 : f32 to vector<6x128xf32>
    %11 = arith.minimumf %10, %9 : vector<6x128xf32>
    %12 = math.floor %11 : vector<6x128xf32>
    %c0_5 = arith.constant 0 : index
    %c0_6 = arith.constant 0 : index
    %13 = vector.load %arg3[%c0_5, %c0_6] : memref<6x128xf32, #tpu.memory_space<vmem>>, vector<6x128xf32>
    %cst_7 = arith.constant 1.275000e+02 : f32
    %14 = vector.broadcast %cst_7 : f32 to vector<6x128xf32>
    %15 = arith.mulf %13, %14 : vector<6x128xf32>
    %cst_8 = arith.constant 1.280000e+02 : f32
    %16 = vector.broadcast %cst_8 : f32 to vector<6x128xf32>
    %17 = arith.addf %15, %16 : vector<6x128xf32>
    %cst_9 = arith.constant 0.000000e+00 : f32
    %cst_10 = arith.constant 2.550000e+02 : f32
    %18 = vector.broadcast %cst_9 : f32 to vector<6x128xf32>
    %19 = arith.maximumf %18, %17 : vector<6x128xf32>
    %20 = vector.broadcast %cst_10 : f32 to vector<6x128xf32>
    %21 = arith.minimumf %20, %19 : vector<6x128xf32>
    %22 = math.floor %21 : vector<6x128xf32>
    %23 = arith.subf %12, %22 : vector<6x128xf32>
    %24 = arith.truncf %23 : vector<6x128xf32> to vector<6x128xbf16>
    %c0_11 = arith.constant 0 : index
    %c0_12 = arith.constant 0 : index
    %25 = vector.load %arg7[%c0_11, %c0_12] : memref<6x194xf32, #tpu.memory_space<vmem>>, vector<6x194xf32>
    %c0_13 = arith.constant 0 : index
    %c0_14 = arith.constant 0 : index
    %c0_15 = arith.constant 0 : index
    %26 = vector.load %arg5[%c0_13, %c0_14, %c0_15] : memref<1x128x194xbf16, #tpu.memory_space<vmem>>, vector<1x128x194xbf16>
    %27 = vector.shape_cast %26 : vector<1x128x194xbf16> to vector<128x194xbf16>
    %cst_16 = arith.constant dense<0.000000e+00> : vector<6x194xf32>
    %28 = tpu.matmul %24, %27, %cst_16 {dimension_numbers = #tpu.dot_dimension_numbers<[1], [0], [0], [1], [0, 0, 1, 1], [], []>} : vector<6x128xbf16>, vector<128x194xbf16>, vector<6x194xf32> -> vector<6x194xf32>
    %29 = arith.addf %25, %28 : vector<6x194xf32>
    %c0_17 = arith.constant 0 : index
    %c0_18 = arith.constant 0 : index
    %30 = vector.load %arg7[%c0_17, %c0_18] : memref<6x194xf32, #tpu.memory_space<vmem>>, vector<6x194xf32>
    tpu.vector_store %arg7[%c0_17, %c0_18], %29 {strides = array<i32>} : memref<6x194xf32, #tpu.memory_space<vmem>>, vector<6x194xf32>,
    %c1_i32 = arith.constant 1 : i32
    %31 = arith.cmpi eq, %arg1, %c1_i32 : i32
    %32 = arith.extui %31 : i1 to i32
    %c0_i32_19 = arith.constant 0 : i32
    %33 = arith.cmpi ne, %32, %c0_i32_19 : i32
    scf.if %33 {
      %c0_20 = arith.constant 0 : index
      %c0_21 = arith.constant 0 : index
      %34 = vector.load %arg4[%c0_20, %c0_21] : memref<2x6xf32, #tpu.memory_space<vmem>>, vector<2x6xf32>
      %c0_22 = arith.constant 0 : index
      %c0_23 = arith.constant 0 : index
      %35 = vector.load %arg7[%c0_22, %c0_23] : memref<6x194xf32, #tpu.memory_space<vmem>>, vector<6x194xf32>
      %cst_24 = arith.constant dense<0.000000e+00> : vector<2x194xf32>
      %36 = tpu.matmul %34, %35, %cst_24 {dimension_numbers = #tpu.dot_dimension_numbers<[1], [0], [0], [1], [0, 0, 1, 1], [], []>} : vector<2x6xf32>, vector<6x194xf32>, vector<2x194xf32> -> vector<2x194xf32>
      %37 = math.absf %36 : vector<2x194xf32>
      %38 = vector.shape_cast %37 : vector<2x194xf32> to vector<1x2x194xf32>
      %cst_25 = arith.constant dense<0.000000e+00> : vector<1xf32>
      %39 = vector.multi_reduction <add>, %38, %cst_25 [1, 2] : vector<1x2x194xf32> to vector<1xf32>
      %40 = vector.shape_cast %39 : vector<1xf32> to vector<1x1x1xf32>
      %41 = vector.extract %40[0, 0, 0] : f32 from vector<1x1x1xf32>
      %cst_26 = arith.constant 6.44329877E-4 : f32
      %42 = arith.mulf %41, %cst_26 : f32
      %cst_27 = arith.constant 0.000000e+00 : f32
      %43 = vector.broadcast %cst_27 : f32 to vector<8x128xf32>
      %44 = vector.broadcast %42 : f32 to vector<8x128xf32>
      %45 = arith.addf %43, %44 : vector<8x128xf32>
      %c0_28 = arith.constant 0 : index
      %c0_29 = arith.constant 0 : index
      %46 = vector.load %arg6[%c0_28, %c0_29] : memref<8x128xf32, #tpu.memory_space<vmem>>, vector<8x128xf32>
      tpu.vector_store %arg6[%c0_28, %c0_29], %45 {strides = array<i32>} : memref<8x128xf32, #tpu.memory_space<vmem>>, vector<8x128xf32>,
    } else {
    }
    return
  }
  func.func @transform_0(%arg0: i32, %arg1: i32) -> (i32, i32) {
    %c0_i32 = arith.constant 0 : i32
    %c0_i32_0 = arith.constant 0 : i32
    return %c0_i32, %arg1 : i32, i32
  }
  func.func @transform_1(%arg0: i32, %arg1: i32) -> (i32, i32) {
    %c0_i32 = arith.constant 0 : i32
    %c0_i32_0 = arith.constant 0 : i32
    return %c0_i32, %arg1 : i32, i32
  }
  func.func @transform_2(%arg0: i32, %arg1: i32) -> (i32, i32) {
    %c0_i32 = arith.constant 0 : i32
    %c0_i32_0 = arith.constant 0 : i32
    %c0_i32_1 = arith.constant 0 : i32
    return %c0_i32, %c0_i32_0 : i32, i32
  }
  func.func @transform_3(%arg0: i32, %arg1: i32) -> (i32, i32, i32) {
    %c0_i32 = arith.constant 0 : i32
    %c0_i32_0 = arith.constant 0 : i32
    return %arg0, %arg1, %c0_i32 : i32, i32, i32
  }
  func.func @transform_4(%arg0: i32, %arg1: i32) -> (i32, i32) {
    %c0_i32 = arith.constant 0 : i32
    %c0_i32_0 = arith.constant 0 : i32
    return %arg0, %c0_i32 : i32, i32
  }
}

</mosaic_0001>

<llo_original>
// kernel: tpu_custom_call.1
$region0: #{tpu_custom_call.1}
  #allocation0 [shape = 'u32[]', space=smem, size = 0x4, offset = 0x4, fixed_abs, tag = 'smem constant byte address 0x4 - core index']
  #allocation1 [shape = 'u32[144,128]{1,0:T(1,128)}', space=vmem, size = 0x12000, scoped, tag = 'internal scratch']
  #allocation2 [shape = 'f32[6,194]{1,0:T(8,128)}', space=vmem, size = 0x2000, scoped, tag = 'scratch operand']
  %s0 = inlined_call_operand.vmem [shape: f32[6,256], index: 0, kind: input, shape index: {}]
  %s1 = inlined_call_operand.vmem [shape: f32[6,256], index: 1, kind: input, shape index: {}]
  %s2 = inlined_call_operand.vmem [shape: f32[2,6], index: 2, kind: input, shape index: {}]
  %s3 = inlined_call_operand.vmem [shape: bf16[2,256,194], index: 3, kind: input, shape index: {}]
  %s4 = inlined_call_operand.hbm [shape: f32[16,128], index: 4, kind: output, shape index: {}]
  %s5 = sld [smem:[#allocation0]]
  $region57: #{tpu_custom_call.1} parent=0
    _
  %s7 = ssub.s32 1, %s5
  %s8 = scalar_select 0, %s7, %s5
  $region1: #{tpu_custom_call.1} parent=0
    #allocation3 [shape = 'u8[8192]{0}', space=vmem, size = 0x2000, scoped, tag = 'output window, operand 0']
    #allocation4 [shape = 's32[2]{0}', space=sflag, size = 0x8, scoped, tag = 'scoped memory for tpu_custom_call.1']
    %9 = vsyncpa [#allocation4], 0
    %s10 = scalar_lea.sflag [#allocation4], 1
    %11 = vsyncpa %s10, 0
    loop: start=0, step=1, limit=6
    $region2: #{tpu_custom_call.1} parent=1 // loop_pre_header
      _
    $region3: #{tpu_custom_call.1} parent=1 // loop_header
      %s13 = sphi 0, %s17
      %p14 = scmp.ge.s32.totalorder %s13, 6
      %s20 = sphi 0, %s32
      %s21 = sphi 0, %s28
      %s22 = sphi 0, %s20
      %s23 = sphi 0, %s21
      %s24 = sphi 0, %s22
      %s25 = sphi 0, %s23
      %s35 = sphi 0, %s37
      %s38 = sphi 0, %s35
      %s39 = sphi 0, %s38
      %s55 = sphi 0, %s39
      %s61 = sphi 0, %s63
      %s64 = sphi 0, %s61
      %s65 = sphi 0, %s64
      %s81 = sphi 0, %s65
      %s85 = sphi 0, %s85
      %s87 = sphi 0, %s85
      %s88 = sphi 0, %s87
      %s102 = sphi 0, %s88
      %s110 = sphi 0, %s112
      %s113 = sphi 0, %s110
      %s114 = sphi 0, %s113
      %s130 = sphi 0, %s114
      %s136 = sphi 0, %s138
      %s139 = sphi 0, %s136
      %s140 = sphi 0, %s139
      %s156 = sphi 0, %s140
    $region4: #{tpu_custom_call.1} parent=1 // loop_header_branch
      %16 = sbr.rel (%p14) target = $region8
    $region5: #{tpu_custom_call.1} parent=1 // loop_body
      %s18 = ssub.s32 %s13, 1
      %s19 = ssub.s32 %s13, 2
      %s26 = sadd.s32 1, %s21
      %p27 = scmp.ge.s32.totalorder %s26, 2
      %s28 = scalar_select %p27, 0, %s26
      %s29 = sadd.s32 1, %s20
      %s30 = scalar_select %p27, %s29, %s20
      %p31 = scmp.ge.s32.totalorder %s30, 2
      %s32 = scalar_select %p31, 0, %s30
      %s33 = ssub.s32 %s21, %s28
      %p34 = scmp.eq.s32.totalorder %s33, 0
      %s36 = sadd.s32 %s35, 1
      %s37 = scalar_select %p34, %s35, %s36
      %p40 = pneg %p34
      %p41 = scmp.eq.s32.totalorder %s13, 3
      %p42 = por %p40, %p41
      %p43 = scmp.ne.s32.totalorder %s35, %s38
      %p44 = scmp.eq.s32.totalorder %s13, 0
      %p45 = por %p43, %p44
      %p46 = scmp.ne.s32.totalorder %s35, %s38
      %p47 = scmp.eq.s32.totalorder %s18, 3
      %p48 = por %p46, %p47
      %p49 = scmp.ne.s32.totalorder %s38, %s39
      %p50 = scmp.eq.s32.totalorder %s18, 0
      %p51 = por %p49, %p50
      %p52 = scmp.ne.s32.totalorder %s38, %s39
      %p53 = scmp.eq.s32.totalorder %s19, 3
      %p54 = por %p52, %p53
      %p56 = scmp.ne.s32.totalorder %s39, %s55
      %p57 = scmp.eq.s32.totalorder %s19, 0
      %p58 = por %p56, %p57
      %s59 = ssub.s32 %s21, %s28
      %p60 = scmp.eq.s32.totalorder %s59, 0
      %s62 = sadd.s32 %s61, 1
      %s63 = scalar_select %p60, %s61, %s62
      %p66 = pneg %p60
      %p67 = scmp.eq.s32.totalorder %s13, 3
      %p68 = por %p66, %p67
      %p69 = scmp.ne.s32.totalorder %s61, %s64
      %p70 = scmp.eq.s32.totalorder %s13, 0
      %p71 = por %p69, %p70
      %p72 = scmp.ne.s32.totalorder %s61, %s64
      %p73 = scmp.eq.s32.totalorder %s18, 3
      %p74 = por %p72, %p73
      %p75 = scmp.ne.s32.totalorder %s64, %s65
      %p76 = scmp.eq.s32.totalorder %s18, 0
      %p77 = por %p75, %p76
      %p78 = scmp.ne.s32.totalorder %s64, %s65
      %p79 = scmp.eq.s32.totalorder %s19, 3
      %p80 = por %p78, %p79
      %p82 = scmp.ne.s32.totalorder %s65, %s81
      %p83 = scmp.eq.s32.totalorder %s19, 0
      %p84 = por %p82, %p83
      %s86 = sadd.s32 %s85, 1
      %p89 = scmp.eq.s32.totalorder %s13, 3
      %p90 = scmp.ne.s32.totalorder %s85, %s87
      %p91 = scmp.eq.s32.totalorder %s13, 0
      %p92 = por %p90, %p91
      %p93 = scmp.ne.s32.totalorder %s85, %s87
      %p94 = scmp.eq.s32.totalorder %s18, 3
      %p95 = por %p93, %p94
      %p96 = scmp.ne.s32.totalorder %s87, %s88
      %p97 = scmp.eq.s32.totalorder %s18, 0
      %p98 = por %p96, %p97
      %p99 = scmp.ne.s32.totalorder %s87, %s88
      %p100 = scmp.eq.s32.totalorder %s19, 3
      %p101 = por %p99, %p100
      %p103 = scmp.ne.s32.totalorder %s88, %s102
      %p104 = scmp.eq.s32.totalorder %s19, 0
      %p105 = por %p103, %p104
      %s106 = ssub.s32 %s20, %s32
      %s107 = ssub.s32 %s21, %s28
      %s108 = sor.u32 %s106, %s107
      %p109 = scmp.eq.s32.totalorder %s108, 0
      %s111 = sadd.s32 %s110, 1
      %s112 = scalar_select %p109, %s110, %s111
      %p115 = pneg %p109
      %p116 = scmp.eq.s32.totalorder %s13, 3
      %p117 = por %p115, %p116
      %p118 = scmp.ne.s32.totalorder %s110, %s113
      %p119 = scmp.eq.s32.totalorder %s13, 0
      %p120 = por %p118, %p119
      %p121 = scmp.ne.s32.totalorder %s110, %s113
      %p122 = scmp.eq.s32.totalorder %s18, 3
      %p123 = por %p121, %p122
      %p124 = scmp.ne.s32.totalorder %s113, %s114
      %p125 = scmp.eq.s32.totalorder %s18, 0
      %p126 = por %p124, %p125
      %p127 = scmp.ne.s32.totalorder %s113, %s114
      %p128 = scmp.eq.s32.totalorder %s19, 3
      %p129 = por %p127, %p128
      %p131 = scmp.ne.s32.totalorder %s114, %s130
      %p132 = scmp.eq.s32.totalorder %s19, 0
      %p133 = por %p131, %p132
      %s134 = ssub.s32 %s20, %s32
      %p135 = scmp.eq.s32.totalorder %s134, 0
      %s137 = sadd.s32 %s136, 1
      %s138 = scalar_select %p135, %s136, %s137
      %p141 = pneg %p135
      %p142 = scmp.eq.s32.totalorder %s13, 3
      %p143 = por %p141, %p142
      %p144 = scmp.ne.s32.totalorder %s136, %s139
      %p145 = scmp.eq.s32.totalorder %s13, 0
      %p146 = por %p144, %p145
      %p147 = scmp.ne.s32.totalorder %s136, %s139
      %p148 = scmp.eq.s32.totalorder %s18, 3
      %p149 = por %p147, %p148
      %p150 = scmp.ne.s32.totalorder %s139, %s140
      %p151 = scmp.eq.s32.totalorder %s18, 0
      %p152 = por %p150, %p151
      %p153 = scmp.ne.s32.totalorder %s139, %s140
      %p154 = scmp.eq.s32.totalorder %s19, 3
      %p155 = por %p153, %p154
      %p157 = scmp.ne.s32.totalorder %s140, %s156
      %p158 = scmp.eq.s32.totalorder %s19, 0
      %p159 = por %p157, %p158
      %p160 = scmp.le.s32.totalorder 1, %s13
      %p161 = scmp.lt.s32.totalorder %s13, 5
      %p162 = pnand %p160, %p161
      %p163 = pneg %p162
      // Predicated region
      $region9: #{tpu_custom_call.1} parent=5 // pred_check
        _
      $region10: #{tpu_custom_call.1} parent=5 // pred_check_branch
        %165 = sbr.rel (%p162) target = $region12
      $region11: #{tpu_custom_call.1} parent=5 // pred_region
        %s166 = ssub.s32 %s13, 1
        // Predicated region
        $region13: #{tpu_custom_call.1} parent=11 // pred_check
          %p167 = pneg %p98
        $region14: #{tpu_custom_call.1} parent=11 // pred_check_branch
          %169 = sbr.rel (%p167) target = $region16
        $region15: #{tpu_custom_call.1} parent=11 // pred_region
          _
        $region16: #{tpu_custom_call.1} parent=11 // pred_fallthru
          _
      $region12: #{tpu_custom_call.1} parent=5 // pred_fallthru
        _
      %p170 = scmp.lt.s32.totalorder %s13, 4
      // Predicated region
      $region17: #{tpu_custom_call.1} parent=5 // pred_check
        %p171 = pneg %p170
      $region18: #{tpu_custom_call.1} parent=5 // pred_check_branch
        %173 = sbr.rel (%p171) target = $region20
      $region19: #{tpu_custom_call.1} parent=5 // pred_region
        // Predicated region
        $region21: #{tpu_custom_call.1} parent=19 // pred_check
          %p174 = pneg %p45
        $region22: #{tpu_custom_call.1} parent=19 // pred_check_branch
          %176 = sbr.rel (%p174) target = $region24
        $region23: #{tpu_custom_call.1} parent=19 // pred_region
          %p177 = scmp.lt.s32.totalorder %s21, 1
          %s178 = scalar_select %p177, %s21, 1
          %s179 = smul.addr %s178, 8
          %s180 = scalar_lea.vmem %s0, %s179
        $region24: #{tpu_custom_call.1} parent=19 // pred_fallthru
          _
        // Predicated region
        $region25: #{tpu_custom_call.1} parent=19 // pred_check
          %p181 = pneg %p71
        $region26: #{tpu_custom_call.1} parent=19 // pred_check_branch
          %183 = sbr.rel (%p181) target = $region28
        $region27: #{tpu_custom_call.1} parent=19 // pred_region
          %p184 = scmp.lt.s32.totalorder %s21, 1
          %s185 = scalar_select %p184, %s21, 1
          %s186 = smul.addr %s185, 8
          %s187 = scalar_lea.vmem %s1, %s186
        $region28: #{tpu_custom_call.1} parent=19 // pred_fallthru
          _
        // Predicated region
        $region29: #{tpu_custom_call.1} parent=19 // pred_check
          %p188 = pneg %p120
        $region30: #{tpu_custom_call.1} parent=19 // pred_check_branch
          %190 = sbr.rel (%p188) target = $region32
        $region31: #{tpu_custom_call.1} parent=19 // pred_region
          %s191 = smul.u32 16, %s21
          %p192 = scmp.lt.s32.totalorder %s20, 1
          %s193 = scalar_select %p192, %s20, 1
          %p194 = scmp.lt.s32.totalorder %s191, 31
          %s195 = scalar_select %p194, %s191, 31
          %s196 = smul.addr %s195, 2
          %s197 = smul.addr %s193, 64
          %s198 = sadd.s32 %s196, %s197
          %s199 = smul.addr %s198, 4
          %s200 = scalar_lea.vmem %s3, %s199
          %s201 = smul.u32 16, %s21
        $region32: #{tpu_custom_call.1} parent=19 // pred_fallthru
          _
      $region20: #{tpu_custom_call.1} parent=5 // pred_fallthru
        _
      %p202 = scmp.le.s32.totalorder 1, %s13
      %p203 = scmp.lt.s32.totalorder %s13, 5
      %p204 = pnand %p202, %p203
      %p205 = pneg %p204
      // Predicated region
      $region33: #{tpu_custom_call.1} parent=5 // pred_check
        _
      $region34: #{tpu_custom_call.1} parent=5 // pred_check_branch
        %207 = sbr.rel (%p204) target = $region36
      $region35: #{tpu_custom_call.1} parent=5 // pred_region
        %s208 = ssub.s32 %s13, 1
        %p209 = scmp.lt.s32.totalorder %s23, 1
        %s210 = scalar_select %p209, %s23, 1
        %s211 = smul.addr %s210, 8
        %s212 = scalar_lea.vmem %s0, %s211
        %p213 = pneg %p51
        %p214 = pneg %p48
        %p215 = scmp.lt.s32.totalorder %s23, 1
        %s216 = scalar_select %p215, %s23, 1
        %s217 = smul.addr %s216, 8
        %s218 = scalar_lea.vmem %s1, %s217
        %p219 = pneg %p77
        %p220 = pneg %p74
        %p221 = pneg %p98
        %p222 = pneg %p95
        %s223 = smul.u32 16, %s23
        %p224 = scmp.lt.s32.totalorder %s22, 1
        %s225 = scalar_select %p224, %s22, 1
        %p226 = scmp.lt.s32.totalorder %s223, 31
        %s227 = scalar_select %p226, %s223, 31
        %s228 = smul.addr %s227, 2
        %s229 = smul.addr %s225, 64
        %s230 = sadd.s32 %s228, %s229
        %s231 = smul.addr %s230, 4
        %s232 = scalar_lea.vmem %s3, %s231
        %p233 = pneg %p126
        %p234 = pneg %p123
        %p235 = pneg %p152
        %p236 = pneg %p149
        %s237 = sand.u32 %s139, 1
        %s238 = scalar_lea.sflag [#allocation4], %s237
        %s239 = sand.u32 %s139, 1
        %s240 = smul.addr %s239, 8
        %s241 = scalar_lea.vmem [#allocation3], %s240
        %p242 = scmp.lt.s32.totalorder %s23, 1
        %s243 = scalar_select %p242, %s23, 1
        %s244 = smul.addr %s243, 8
        %s245 = scalar_lea.vmem %s0, %s244
        %p246 = scmp.lt.s32.totalorder %s23, 1
        %s247 = scalar_select %p246, %s23, 1
        %s248 = smul.addr %s247, 8
        %s249 = scalar_lea.vmem %s1, %s248
        %s250 = smul.u32 16, %s23
        %p251 = scmp.lt.s32.totalorder %s22, 1
        %s252 = scalar_select %p251, %s22, 1
        %p253 = scmp.lt.s32.totalorder %s250, 31
        %s254 = scalar_select %p253, %s250, 31
        %s255 = smul.addr %s254, 2
        %s256 = smul.addr %s252, 64
        %s257 = sadd.s32 %s255, %s256
        %s258 = smul.addr %s257, 4
        %s259 = scalar_lea.vmem %s3, %s258
        %s260 = smul.u32 16, %s23
        %p262 = scmp.eq.s32.totalorder %s23, 0
        // Predicated region
        $region37: #{tpu_custom_call.1} parent=35 // pred_check
          %p263 = pneg %p262
        $region38: #{tpu_custom_call.1} parent=35 // pred_check_branch
          %265 = sbr.rel (%p263) target = $region40
        $region39: #{tpu_custom_call.1} parent=35 // pred_region
          %266 = vst [vmem:[#allocation2] sm:$0x3f] 0.0
          %vm267 = vcmask 537600
          %268 = vst.msk [vmem:[#allocation2 + $0x8] sm:$0x3f] %vm267, 0.0
        $region40: #{tpu_custom_call.1} parent=35 // pred_fallthru
          _
        %v269 = vld [vmem:[%s245] sm:$0x3f]
        %v270 = vmul.f32 %v269, 127.5
        %v271 = vadd.f32 %v270, 128.0
        %v272 = vmax.f32 %v271, 0.0
        %v273 = vmin.f32 %v272, 255.0
        %v274 = vfloor.f32 %v273
        %v275 = vld [vmem:[%s249] sm:$0x3f]
        %v276 = vmul.f32 %v275, 127.5
        %v277 = vadd.f32 %v276, 128.0
        %v278 = vmax.f32 %v277, 0.0
        %v279 = vmin.f32 %v278, 255.0
        %v280 = vfloor.f32 %v279
        %v281 = vsub.f32 %v274, %v280
        %v282 = vpack.c.bf16 %v281, %v281
        %v283 = vld [vmem:[#allocation2] sm:$0x3f]
        %v284 = vld [vmem:[#allocation2 + $0x8] sm:$0x3f]
        %v285 = vld [vmem:[%s259] sm:$0xff]
        %v286 = vld [vmem:[%s259 + $0x8] sm:$0xff]
        %v287 = vld [vmem:[%s259 + $0x10] sm:$0xff]
        %v288 = vld [vmem:[%s259 + $0x18] sm:$0xff]
        %v289 = vld [vmem:[%s259 + $0x20] sm:$0xff]
        %v290 = vld [vmem:[%s259 + $0x28] sm:$0xff]
        %v291 = vld [vmem:[%s259 + $0x30] sm:$0xff]
        %v292 = vld [vmem:[%s259 + $0x38] sm:$0xff]
        %v293 = vld [vmem:[%s259 + $0x40] sm:$0xff]
        %v294 = vld [vmem:[%s259 + $0x48] sm:$0xff]
        %v295 = vld [vmem:[%s259 + $0x50] sm:$0xff]
        %v296 = vld [vmem:[%s259 + $0x58] sm:$0xff]
        %v297 = vld [vmem:[%s259 + $0x60] sm:$0xff]
        %v298 = vld [vmem:[%s259 + $0x68] sm:$0xff]
        %v299 = vld [vmem:[%s259 + $0x70] sm:$0xff]
        %v300 = vld [vmem:[%s259 + $0x78] sm:$0xff]
        %v317 = vunpack.c.l.b16 %v285
        %v318 = vunpack.c.h.b16 %v285
        %v319 = vunpack.c.l.b16 %v286
        %v320 = vunpack.c.h.b16 %v286
        %v321 = vunpack.c.l.b16 %v287
        %v322 = vunpack.c.h.b16 %v287
        %v323 = vunpack.c.l.b16 %v288
        %v324 = vunpack.c.h.b16 %v288
        %v325 = vunpack.c.l.b16 %v289
        %v326 = vunpack.c.h.b16 %v289
        %v327 = vunpack.c.l.b16 %v290
        %v328 = vunpack.c.h.b16 %v290
        %v329 = vunpack.c.l.b16 %v291
        %v330 = vunpack.c.h.b16 %v291
        %v331 = vunpack.c.l.b16 %v292
        %v332 = vunpack.c.h.b16 %v292
        %v333 = vunpack.c.l.b16 %v293
        %v334 = vunpack.c.h.b16 %v293
        %v335 = vunpack.c.l.b16 %v294
        %v336 = vunpack.c.h.b16 %v294
        %v337 = vunpack.c.l.b16 %v295
        %v338 = vunpack.c.h.b16 %v295
        %v339 = vunpack.c.l.b16 %v296
        %v340 = vunpack.c.h.b16 %v296
        %v341 = vunpack.c.l.b16 %v297
        %v342 = vunpack.c.h.b16 %v297
        %v343 = vunpack.c.l.b16 %v298
        %v344 = vunpack.c.h.b16 %v298
        %v345 = vunpack.c.l.b16 %v299
        %v346 = vunpack.c.h.b16 %v299
        %v347 = vunpack.c.l.b16 %v300
        %v348 = vunpack.c.h.b16 %v300
        %v349 = vpack.c.b16 %v319, %v317
        %v350 = vpack.c.b16 %v320, %v318
        %v351 = vpack.c.b16 %v323, %v321
        %v352 = vpack.c.b16 %v324, %v322
        %v353 = vpack.c.b16 %v327, %v325
        %v354 = vpack.c.b16 %v328, %v326
        %v355 = vpack.c.b16 %v331, %v329
        %v356 = vpack.c.b16 %v332, %v330
        %v357 = vpack.c.b16 %v335, %v333
        %v358 = vpack.c.b16 %v336, %v334
        %v359 = vpack.c.b16 %v339, %v337
        %v360 = vpack.c.b16 %v340, %v338
        %v361 = vpack.c.b16 %v343, %v341
        %v362 = vpack.c.b16 %v344, %v342
        %v363 = vpack.c.b16 %v347, %v345
        %v364 = vpack.c.b16 %v348, %v346
        %381 = vmatprep.subr.bf16.mxu0 %v364
        %382 = vmatpush1.bf16.msra.mxu0 %v363
        %383 = vmatprep.subr.bf16.mxu0 %v362
        %384 = vmatpush1.bf16.msra.mxu0 %v361
        %385 = vmatprep.subr.bf16.mxu0 %v360
        %386 = vmatpush1.bf16.msra.mxu0 %v359
        %387 = vmatprep.subr.bf16.mxu0 %v358
        %388 = vmatpush1.bf16.msra.mxu0 %v357
        %389 = vmatprep.subr.bf16.mxu0 %v356
        %390 = vmatpush1.bf16.msra.mxu0 %v355
        %391 = vmatprep.subr.bf16.mxu0 %v354
        %392 = vmatpush1.bf16.msra.mxu0 %v353
        %393 = vmatprep.subr.bf16.mxu0 %v352
        %394 = vmatpush1.bf16.msra.mxu0 %v351
        %395 = vmatprep.subr.bf16.mxu0 %v350
        %396 = vmatpush1.bf16.msra.mxu0 %v349
        %397 = vmatprep.subr.bf16.mxu0 0
        %398 = vmatpush2.bf16.msra.mxu0 0
        %399 = vmatprep.subr.bf16.mxu0 0
        %400 = vmatpush2.bf16.msra.mxu0 0
        %401 = vmatprep.subr.bf16.mxu0 0
        %402 = vmatpush2.bf16.msra.mxu0 0
        %403 = vmatprep.subr.bf16.mxu0 0
        %404 = vmatpush2.bf16.msra.mxu0 0
        %405 = vmatprep.subr.bf16.mxu0 0
        %406 = vmatpush2.bf16.msra.mxu0 0
        %407 = vmatprep.subr.bf16.mxu0 0
        %408 = vmatpush2.bf16.msra.mxu0 0
        %409 = vmatprep.subr.bf16.mxu0 0
        %410 = vmatpush2.bf16.msra.mxu0 0
        %411 = vmatprep.subr.bf16.mxu0 0
        %412 = vmatpush2.bf16.msra.mxu0 0
        %413 = vmatprep.mubr.bf16.mxu0 0
        %414 = vmatmul.mubr.bf16.gmra.mxu0 %v282
        %v415 = vpop.f32.mrf.mxu0
        %v416 = vadd.f32 0.0, %v415
        %v417 = vpop.f32.mrf.mxu0
        %v418 = vadd.f32 0.0, %v417
        %v419 = vpop.f32.mrf.mxu0
        %v420 = vpop.f32.mrf.mxu0
        %421 = vdwg.mxu0
        %v422 = vadd.f32 %v283, %v416
        %v423 = vadd.f32 %v284, %v418
        %424 = vst [vmem:[#allocation2] sm:$0x3f] %v422
        %vm425 = vcmask 537600
        %426 = vst.msk [vmem:[#allocation2 + $0x8] sm:$0x3f] %vm425, %v423
        %p427 = scmp.eq.s32.totalorder %s23, 1
        // Predicated region
        $region41: #{tpu_custom_call.1} parent=35 // pred_check
          %p428 = pneg %p427
        $region42: #{tpu_custom_call.1} parent=35 // pred_check_branch
          %430 = sbr.rel (%p428) target = $region44
        $region43: #{tpu_custom_call.1} parent=35 // pred_region
          %v431 = vld [vmem:[%s2] sm:$0x3]
          %v432 = vld [vmem:[#allocation2] sm:$0x3f]
          %v433 = vld [vmem:[#allocation2 + $0x8] sm:$0x3f]
          %vm434 = vcmask 48128
          %v436 = vsel %vm434, %v431, 0
          %vm438 = vcmask 1045504
          %v440 = vsel %vm438, %v432, 0
          %v443 = vsel %vm438, %v433, 0
          %445 = vmatprep.subr.mxu0 0.0
          %446 = vmatpush1.msra.mxu0 0.0
          %447 = vmatprep.subr.mxu0 0.0
          %448 = vmatpush1.msra.mxu0 0.0
          %449 = vmatprep.subr.mxu0 0.0
          %450 = vmatpush1.msra.mxu0 0.0
          %451 = vmatprep.subr.mxu0 0.0
          %452 = vmatpush1.msra.mxu0 0.0
          %453 = vmatprep.subr.mxu0 0.0
          %454 = vmatpush1.msra.mxu0 0.0
          %455 = vmatprep.subr.mxu0 0.0
          %456 = vmatpush1.msra.mxu0 0.0
          %457 = vmatprep.subr.mxu0 0.0
          %458 = vmatpush1.msra.mxu0 0.0
          %459 = vmatprep.subr.mxu0 0.0
          %460 = vmatpush1.msra.mxu0 0.0
          %461 = vmatprep.subr.mxu0 0.0
          %462 = vmatpush1.msra.mxu0 0.0
          %463 = vmatprep.subr.mxu0 0.0
          %464 = vmatpush1.msra.mxu0 0.0
          %465 = vmatprep.subr.mxu0 0.0
          %466 = vmatpush1.msra.mxu0 0.0
          %467 = vmatprep.subr.mxu0 0.0
          %468 = vmatpush1.msra.mxu0 0.0
          %469 = vmatprep.subr.mxu0 0.0
          %470 = vmatpush1.msra.mxu0 0.0
          %471 = vmatprep.subr.mxu0 0.0
          %472 = vmatpush1.msra.mxu0 0.0
          %473 = vmatprep.subr.mxu0 0.0
          %474 = vmatpush1.msra.mxu0 0.0
          %475 = vmatprep.subr.mxu0 %v443
          %476 = vmatpush1.msra.mxu0 %v440
          %477 = vmatprep.subr.mxu0 0.0
          %478 = vmatpush2.msra.mxu0 0.0
          %479 = vmatprep.subr.mxu0 0.0
          %480 = vmatpush2.msra.mxu0 0.0
          %481 = vmatprep.subr.mxu0 0.0
          %482 = vmatpush2.msra.mxu0 0.0
          %483 = vmatprep.subr.mxu0 0.0
          %484 = vmatpush2.msra.mxu0 0.0
          %485 = vmatprep.subr.mxu0 0.0
          %486 = vmatpush2.msra.mxu0 0.0
          %487 = vmatprep.subr.mxu0 0.0
          %488 = vmatpush2.msra.mxu0 0.0
          %489 = vmatprep.subr.mxu0 0.0
          %490 = vmatpush2.msra.mxu0 0.0
          %491 = vmatprep.subr.mxu0 0.0
          %492 = vmatpush2.msra.mxu0 0.0
          %493 = vmatprep.subr.mxu0 0.0
          %494 = vmatpush2.msra.mxu0 0.0
          %495 = vmatprep.subr.mxu0 0.0
          %496 = vmatpush2.msra.mxu0 0.0
          %497 = vmatprep.subr.mxu0 0.0
          %498 = vmatpush2.msra.mxu0 0.0
          %499 = vmatprep.subr.mxu0 0.0
          %500 = vmatpush2.msra.mxu0 0.0
          %501 = vmatprep.subr.mxu0 0.0
          %502 = vmatpush2.msra.mxu0 0.0
          %503 = vmatprep.subr.mxu0 0.0
          %504 = vmatpush2.msra.mxu0 0.0
          %505 = vmatprep.subr.mxu0 0.0
          %506 = vmatpush2.msra.mxu0 0.0
          %507 = vmatprep.subr.mxu0 0.0
          %508 = vmatpush2.msra.mxu0 0.0
          %509 = vmatprep.mubr.f32.mxu0 0.0
          %510 = vmatmul.mubr.f32.gmra.mxu0 %v436
          %v511 = vpop.f32.mrf.mxu0
          %v512 = vadd.f32 0.0, %v511
          %v513 = vpop.f32.mrf.mxu0
          %v514 = vadd.f32 0.0, %v513
          %515 = vdwg.mxu0
          %v516 = vand.u32 2147483647, %v512
          %v517 = vand.u32 2147483647, %v514
          %vm518 = vcmask 1041408
          %v519 = vsel %vm518, %v516, 0.0
          %vm520 = vcmask 533504
          %v521 = vsel %vm520, %v517, 0.0
          %v522 = vadd.f32 %v519, %v521
          %523 = vadd.xlane.f32.xlu0 %v522
          %v524 = vpop.xlane.xlu0 %523
          %v525 = vrot.slane %v524, 4
          %v526 = vadd.f32 %v524, %v525
          %v527 = vrot.slane %v526, 2
          %v528 = vadd.f32 %v526, %v527
          %v529 = vrot.slane %v528, 1
          %v530 = vadd.f32 %v528, %v529
          %s531 = vtos %v530
          %s532 = smul.f32 %s531, 0.0006443299
          %v533 = vstv %s532
          %v534 = vadd.f32 %v533, 0.0
          %535 = vst [vmem:[%s241] sm:$0xff] %v534
        $region44: #{tpu_custom_call.1} parent=35 // pred_fallthru
          _
        %s536 = sand.u32 %s139, 1
        %s537 = scalar_lea.sflag [#allocation4], %s536
        %s538 = sand.u32 %s139, 1
        %s539 = smul.addr %s538, 8
        %s540 = scalar_lea.vmem [#allocation3], %s539
        // Predicated region
        $region45: #{tpu_custom_call.1} parent=35 // pred_check
          %p541 = pneg %p149
        $region46: #{tpu_custom_call.1} parent=35 // pred_check_branch
          %543 = sbr.rel (%p541) target = $region48
        $region47: #{tpu_custom_call.1} parent=35 // pred_region
          %s545 = ssub.s32 128, 128
          %546 = vsyncadd %s537, %s545
          %s547 = smul.addr %s22, 128
          %s548 = scalar_lea.hbm %s4, %s547
          %s550 = sshll.u32 %s540, 4
          %s551 = int_to_ptr.vmem [resolvable:$true] %s550
          %553 = dma.vmem_to_hbm [thread:$0]  %s551, 128, %s548, %s537
        $region48: #{tpu_custom_call.1} parent=35 // pred_fallthru
          _
      $region36: #{tpu_custom_call.1} parent=5 // pred_fallthru
        _
      %p554 = scmp.le.s32.totalorder 2, %s13
      // Predicated region
      $region49: #{tpu_custom_call.1} parent=5 // pred_check
        %p555 = pneg %p554
      $region50: #{tpu_custom_call.1} parent=5 // pred_check_branch
        %557 = sbr.rel (%p555) target = $region52
      $region51: #{tpu_custom_call.1} parent=5 // pred_region
        %s558 = ssub.s32 %s13, 2
        // Predicated region
        $region53: #{tpu_custom_call.1} parent=51 // pred_check
          %p559 = pneg %p155
        $region54: #{tpu_custom_call.1} parent=51 // pred_check_branch
          %561 = sbr.rel (%p559) target = $region56
        $region55: #{tpu_custom_call.1} parent=51 // pred_region
          %s562 = sand.u32 %s140, 1
          %s563 = scalar_lea.sflag [#allocation4], %s562
          %s564 = sand.u32 %s140, 1
          %s565 = smul.addr %s564, 8
          %s566 = scalar_lea.vmem [#allocation3], %s565
          %567 = dma.done %s563, 128
        $region56: #{tpu_custom_call.1} parent=51 // pred_fallthru
          _
      $region52: #{tpu_custom_call.1} parent=5 // pred_fallthru
        _
    $region6: #{tpu_custom_call.1} parent=1 // loop_footer
      %s17 = sadd.s32 1, %s13
    $region7: #{tpu_custom_call.1} parent=1 // loop_footer_branch
      %12 = sbr.rel target = $region3
    $region8: #{tpu_custom_call.1} parent=1 // loop_exit
      _
    %568 = vsyncpa [#allocation4], 1
    %s569 = scalar_lea.sflag [#allocation4], 1
    %570 = vsyncpa %s569, 1

</llo_original>
